<compile_context>
chip_gen: v7x
topology: tpu7x:2x2x1
jax: 0.10.0
libtpu: 0.0.40
codegen_flags: <defaults>
</compile_context>

<pallas_src>
import jax
import jax.numpy as jnp
from jax.experimental import pallas as pl
from jax.experimental.pallas import tpu as pltpu

N, H, W = 1, 14, 14
C_SE_IN, C_MID, C_OUT = 22, 528, 88
HW = H * W
BN_EPS = 1e-5


def se_conv_bn_kernel(xse_ref, w1_ref, b1_ref, w2_ref, x_ref,
                      gamma_ref, beta_ref, o_ref):
    # conv2d57: 1x1 conv on a 1x1 spatial input == (1,22) @ (22,528) + bias
    se = jnp.dot(xse_ref[...], w1_ref[...],
                 preferred_element_type=jnp.float32) + b1_ref[...]       # (1, 528)
    # sigmoid11
    gate = jax.nn.sigmoid(se)                                            # (1, 528)
    # Fold the SE gate into the small conv2d58 weight instead of scaling the
    # big activation:  sum_c w2[o,c]*(gate[c]*x[c,p]) == sum_c (w2[o,c]*gate[c])*x[c,p]
    w2_scaled = w2_ref[...] * gate                                       # (88, 528)
    # conv2d58: 1x1 conv, no bias == channel-space matmul in (C, HW) layout
    y = jnp.dot(w2_scaled, x_ref[...],
                preferred_element_type=jnp.float32)                      # (88, 196)
    # batchnorm2d34 (training mode -> batch statistics, biased variance over
    # the N*H*W = 196 spatial positions per output channel)
    mean = jnp.mean(y, axis=1, keepdims=True)                            # (88, 1)
    d = y - mean
    var = jnp.mean(d * d, axis=1, keepdims=True)                         # (88, 1)
    inv = jax.lax.rsqrt(var + BN_EPS)
    o_ref[...] = d * inv * gamma_ref[...] + beta_ref[...]                # (88, 196)


def m_forward(x174, x171, w1, b1, w2, gamma, beta):
    """x174: (1,22,1,1) NCHW, x171: (1,528,14,14) NCHW -> (1,88,14,14) NCHW."""
    # Free reshapes of contiguous NCHW memory (no data movement):
    xse = x174.reshape(1, C_SE_IN)                      # (1, 22)
    x_c_hw = x171.reshape(C_MID, HW)                    # (528, 196)
    w2_r = w2.reshape(C_OUT, C_MID)                     # (88, 528)
    b1_r = b1.reshape(1, C_MID)                         # (1, 528)
    gamma_r = gamma.reshape(C_OUT, 1)                   # (88, 1)
    beta_r = beta.reshape(C_OUT, 1)                     # (88, 1)
    # Only non-free layout op: tiny (528,22) -> (22,528) weight transpose.
    w1_t = w1.reshape(C_MID, C_SE_IN).T                 # (22, 528)

    cost = pl.CostEstimate(
        flops=2 * C_OUT * C_MID * HW + 2 * C_MID * C_SE_IN + C_OUT * C_MID,
        transcendentals=C_MID,  # sigmoid over 528 channels
        bytes_accessed=4 * (C_MID * HW + C_OUT * HW + C_MID * C_SE_IN
                            + C_OUT * C_MID + C_MID + 2 * C_OUT + C_SE_IN),
    )

    out_c_hw = pl.pallas_call(
        se_conv_bn_kernel,
        out_shape=jax.ShapeDtypeStruct((C_OUT, HW), jnp.float32),
        in_specs=[pl.BlockSpec(memory_space=pltpu.MemorySpace.VMEM)] * 7,
        out_specs=pl.BlockSpec(memory_space=pltpu.MemorySpace.VMEM),
        cost_estimate=cost,
    )(xse, w1_t, b1_r, w2_r, x_c_hw, gamma_r, beta_r)

    # (88, 196) -> (1, 88, 14, 14): free reshape back to NCHW.
    return out_c_hw.reshape(N, C_OUT, H, W)


def reference_forward(x174, x171, w1, b1, w2, gamma, beta):
    """Pure-JAX reference mirroring the PyTorch module in training mode."""
    se = jnp.einsum('oc,nchw->nohw', w1.reshape(C_MID, C_SE_IN), x174) \
        + b1.reshape(1, C_MID, 1, 1)
    gate = jax.nn.sigmoid(se)
    xg = gate * x171
    y = jnp.einsum('oc,nchw->nohw', w2.reshape(C_OUT, C_MID), xg)
    mean = jnp.mean(y, axis=(0, 2, 3), keepdims=True)
    var = jnp.mean((y - mean) ** 2, axis=(0, 2, 3), keepdims=True)
    return (y - mean) * jax.lax.rsqrt(var + BN_EPS) \
        * gamma.reshape(1, C_OUT, 1, 1) + beta.reshape(1, C_OUT, 1, 1)


if __name__ == "__main__":
    key = jax.random.PRNGKey(0)
    k_x171, k_x174, k_w1, k_b1, k_w2 = jax.random.split(key, 5)

    # Deterministic synthetic parameters (shapes from the module's __init__).
    x171 = jax.random.normal(k_x171, (N, C_MID, H, W), jnp.float32)
    x174 = jax.random.normal(k_x174, (N, C_SE_IN, 1, 1), jnp.float32)
    w1 = jax.random.normal(k_w1, (C_MID, C_SE_IN, 1, 1), jnp.float32) * 0.1
    b1 = jax.random.normal(k_b1, (C_MID,), jnp.float32) * 0.1
    w2 = jax.random.normal(k_w2, (C_OUT, C_MID, 1, 1), jnp.float32) * 0.05
    gamma = jnp.ones((C_OUT,), jnp.float32)   # BatchNorm2d default weight
    beta = jnp.zeros((C_OUT,), jnp.float32)   # BatchNorm2d default bias

    fwd = jax.jit(m_forward)
    out = jax.block_until_ready(fwd(x174, x171, w1, b1, w2, gamma, beta))
    ref = jax.block_until_ready(
        reference_forward(x174, x171, w1, b1, w2, gamma, beta))

    assert out.shape == (N, C_OUT, H, W)
    assert jnp.allclose(out, ref, atol=1e-4, rtol=1e-4)
    # TODO(synk): PyTorch training-mode BN also updates running_mean/var as a
    # side effect; only the forward output is produced here.
    print("KERNEL_OK")
</pallas_src>

<mosaic_0001>
module attributes {stable_mosaic.version = 11 : i64} {
  func.func @se_conv_bn_kernel(%arg0: memref<1x22xf32, #tpu.memory_space<vmem>>, %arg1: memref<22x528xf32, #tpu.memory_space<vmem>>, %arg2: memref<1x528xf32, #tpu.memory_space<vmem>>, %arg3: memref<88x528xf32, #tpu.memory_space<vmem>>, %arg4: memref<528x196xf32, #tpu.memory_space<vmem>>, %arg5: memref<88x1xf32, #tpu.memory_space<vmem>>, %arg6: memref<88x1xf32, #tpu.memory_space<vmem>>, %arg7: memref<88x196xf32, #tpu.memory_space<vmem>>) attributes {dimension_semantics = [], scalar_prefetch = 0 : i64, scratch_operands = 0 : i64, tpu.core_type = #tpu.core_type<tc>} {
    %c0 = arith.constant 0 : index
    %c0_0 = arith.constant 0 : index
    %0 = vector.load %arg0[%c0, %c0_0] : memref<1x22xf32, #tpu.memory_space<vmem>>, vector<1x22xf32>
    %c0_1 = arith.constant 0 : index
    %c0_2 = arith.constant 0 : index
    %1 = vector.load %arg1[%c0_1, %c0_2] : memref<22x528xf32, #tpu.memory_space<vmem>>, vector<22x528xf32>
    %cst = arith.constant dense<0.000000e+00> : vector<1x528xf32>
    %2 = tpu.matmul %0, %1, %cst {dimension_numbers = #tpu.dot_dimension_numbers<[1], [0], [0], [1], [0, 0, 1, 1], [], []>} : vector<1x22xf32>, vector<22x528xf32>, vector<1x528xf32> -> vector<1x528xf32>
    %c0_3 = arith.constant 0 : index
    %c0_4 = arith.constant 0 : index
    %3 = vector.load %arg2[%c0_3, %c0_4] : memref<1x528xf32, #tpu.memory_space<vmem>>, vector<1x528xf32>
    %4 = arith.addf %2, %3 : vector<1x528xf32>
    %5 = arith.negf %4 : vector<1x528xf32>
    %6 = math.exp %5 : vector<1x528xf32>
    %cst_5 = arith.constant 1.000000e+00 : f32
    %7 = vector.broadcast %cst_5 : f32 to vector<1x528xf32>
    %8 = arith.addf %7, %6 : vector<1x528xf32>
    %9 = arith.divf %7, %8 : vector<1x528xf32>
    %c0_6 = arith.constant 0 : index
    %c0_7 = arith.constant 0 : index
    %10 = vector.load %arg3[%c0_6, %c0_7] : memref<88x528xf32, #tpu.memory_space<vmem>>, vector<88x528xf32>
    %11 = vector.broadcast %9 : vector<1x528xf32> to vector<88x528xf32>
    %12 = arith.mulf %10, %11 : vector<88x528xf32>
    %c0_8 = arith.constant 0 : index
    %c0_9 = arith.constant 0 : index
    %13 = vector.load %arg4[%c0_8, %c0_9] : memref<528x196xf32, #tpu.memory_space<vmem>>, vector<528x196xf32>
    %cst_10 = arith.constant dense<0.000000e+00> : vector<88x196xf32>
    %14 = tpu.matmul %12, %13, %cst_10 {dimension_numbers = #tpu.dot_dimension_numbers<[1], [0], [0], [1], [0, 0, 1, 1], [], []>} : vector<88x528xf32>, vector<528x196xf32>, vector<88x196xf32> -> vector<88x196xf32>
    %cst_11 = arith.constant dense<0.000000e+00> : vector<88xf32>
    %15 = vector.multi_reduction <add>, %14, %cst_11 [1] : vector<88x196xf32> to vector<88xf32>
    %16 = vector.shape_cast %15 : vector<88xf32> to vector<88x1xf32>
    %cst_12 = arith.constant 1.960000e+02 : f32
    %17 = vector.broadcast %cst_12 : f32 to vector<88x1xf32>
    %18 = arith.divf %16, %17 : vector<88x1xf32>
    %19 = vector.broadcast %18 : vector<88x1xf32> to vector<88x196xf32>
    %20 = arith.subf %14, %19 : vector<88x196xf32>
    %21 = arith.mulf %20, %20 : vector<88x196xf32>
    %cst_13 = arith.constant dense<0.000000e+00> : vector<88xf32>
    %22 = vector.multi_reduction <add>, %21, %cst_13 [1] : vector<88x196xf32> to vector<88xf32>
    %23 = vector.shape_cast %22 : vector<88xf32> to vector<88x1xf32>
    %cst_14 = arith.constant 1.960000e+02 : f32
    %24 = vector.broadcast %cst_14 : f32 to vector<88x1xf32>
    %25 = arith.divf %23, %24 : vector<88x1xf32>
    %cst_15 = arith.constant 9.99999974E-6 : f32
    %26 = vector.broadcast %cst_15 : f32 to vector<88x1xf32>
    %27 = arith.addf %25, %26 : vector<88x1xf32>
    %28 = math.rsqrt %27 : vector<88x1xf32>
    %29 = vector.broadcast %28 : vector<88x1xf32> to vector<88x196xf32>
    %30 = arith.mulf %20, %29 : vector<88x196xf32>
    %c0_16 = arith.constant 0 : index
    %c0_17 = arith.constant 0 : index
    %31 = vector.load %arg5[%c0_16, %c0_17] : memref<88x1xf32, #tpu.memory_space<vmem>>, vector<88x1xf32>
    %32 = vector.broadcast %31 : vector<88x1xf32> to vector<88x196xf32>
    %33 = arith.mulf %30, %32 : vector<88x196xf32>
    %c0_18 = arith.constant 0 : index
    %c0_19 = arith.constant 0 : index
    %34 = vector.load %arg6[%c0_18, %c0_19] : memref<88x1xf32, #tpu.memory_space<vmem>>, vector<88x1xf32>
    %35 = vector.broadcast %34 : vector<88x1xf32> to vector<88x196xf32>
    %36 = arith.addf %33, %35 : vector<88x196xf32>
    %c0_20 = arith.constant 0 : index
    %c0_21 = arith.constant 0 : index
    %37 = vector.load %arg7[%c0_20, %c0_21] : memref<88x196xf32, #tpu.memory_space<vmem>>, vector<88x196xf32>
    tpu.vector_store %arg7[%c0_20, %c0_21], %36 {strides = array<i32>} : memref<88x196xf32, #tpu.memory_space<vmem>>, vector<88x196xf32>,
    return
  }
}

</mosaic_0001>

<llo_original>
// kernel: m_forward.1
$region0: #{m_forward.1}
  #allocation0 [shape = 'u32[]', space=smem, size = 0x4, offset = 0x4, fixed_abs, tag = 'smem constant byte address 0x4 - core index']
  #allocation1 [shape = 'u32[144,128]{1,0:T(1,128)}', space=vmem, size = 0x12000, scoped, tag = 'internal scratch']
  %s0 = inlined_call_operand.vmem [shape: f32[1,22], index: 0, kind: input, shape index: {}]
  %s1 = inlined_call_operand.vmem [shape: f32[22,528], index: 1, kind: input, shape index: {}]
  %s2 = inlined_call_operand.vmem [shape: f32[1,528], index: 2, kind: input, shape index: {}]
  %s3 = inlined_call_operand.vmem [shape: f32[88,528], index: 3, kind: input, shape index: {}]
  %s4 = inlined_call_operand.vmem [shape: f32[528,196], index: 4, kind: input, shape index: {}]
  %s5 = inlined_call_operand.vmem [shape: f32[88,1], index: 5, kind: input, shape index: {}]
  %s6 = inlined_call_operand.vmem [shape: f32[88,1], index: 6, kind: input, shape index: {}]
  %s7 = inlined_call_operand.vmem [shape: f32[88,196], index: 7, kind: output, shape index: {}]
  %s8 = sld [smem:[#allocation0]]
  $region38: #{m_forward.1} parent=0
    _
  %s10 = ssub.s32 1, %s8
  %s11 = scalar_select 0, %s10, %s8
  // Predicated region
  $region2: #{m_forward.1} parent=0 // pred_check
    _
  $region3: #{m_forward.1} parent=0 // pred_check_branch
    %13 = sbr.rel (0) target = $region5
  $region4: #{m_forward.1} parent=0 // pred_region
    _
  $region5: #{m_forward.1} parent=0 // pred_fallthru
    _
  // Predicated region
  $region6: #{m_forward.1} parent=0 // pred_check
    _
  $region7: #{m_forward.1} parent=0 // pred_check_branch
    %15 = sbr.rel (0) target = $region9
  $region8: #{m_forward.1} parent=0 // pred_region
    _
  $region9: #{m_forward.1} parent=0 // pred_fallthru
    _
  // Predicated region
  $region10: #{m_forward.1} parent=0 // pred_check
    _
  $region11: #{m_forward.1} parent=0 // pred_check_branch
    %17 = sbr.rel (0) target = $region13
  $region12: #{m_forward.1} parent=0 // pred_region
    _
  $region13: #{m_forward.1} parent=0 // pred_fallthru
    _
  // Predicated region
  $region14: #{m_forward.1} parent=0 // pred_check
    _
  $region15: #{m_forward.1} parent=0 // pred_check_branch
    %19 = sbr.rel (0) target = $region17
  $region16: #{m_forward.1} parent=0 // pred_region
    _
  $region17: #{m_forward.1} parent=0 // pred_fallthru
    _
  // Predicated region
  $region18: #{m_forward.1} parent=0 // pred_check
    _
  $region19: #{m_forward.1} parent=0 // pred_check_branch
    %21 = sbr.rel (0) target = $region21
  $region20: #{m_forward.1} parent=0 // pred_region
    _
  $region21: #{m_forward.1} parent=0 // pred_fallthru
    _
  // Predicated region
  $region22: #{m_forward.1} parent=0 // pred_check
    _
  $region23: #{m_forward.1} parent=0 // pred_check_branch
    %23 = sbr.rel (0) target = $region25
  $region24: #{m_forward.1} parent=0 // pred_region
    _
  $region25: #{m_forward.1} parent=0 // pred_fallthru
    _
  // Predicated region
  $region26: #{m_forward.1} parent=0 // pred_check
    _
  $region27: #{m_forward.1} parent=0 // pred_check_branch
    %25 = sbr.rel (0) target = $region29
  $region28: #{m_forward.1} parent=0 // pred_region
    _
  $region29: #{m_forward.1} parent=0 // pred_fallthru
    _
  %v26 = vld [vmem:[%s0] sm:$0x1]
  %v27 = vld [vmem:[%s1] sm:$0xff]
  %v28 = vld [vmem:[%s1 + $0x8] sm:$0xff]
  %v29 = vld [vmem:[%s1 + $0x10] sm:$0xff]
  %v30 = vld [vmem:[%s1 + $0x18] sm:$0xff]
  %v31 = vld [vmem:[%s1 + $0x20] sm:$0xff]
  %v32 = vld [vmem:[%s1 + $0x28] sm:$0xff]
  %v33 = vld [vmem:[%s1 + $0x30] sm:$0xff]
  %v34 = vld [vmem:[%s1 + $0x38] sm:$0xff]
  %v35 = vld [vmem:[%s1 + $0x40] sm:$0xff]
  %v36 = vld [vmem:[%s1 + $0x48] sm:$0xff]
  %v37 = vld [vmem:[%s1 + $0x50] sm:$0x3f]
  %v38 = vld [vmem:[%s1 + $0x58] sm:$0x3f]
  %v39 = vld [vmem:[%s1 + $0x60] sm:$0x3f]
  %v40 = vld [vmem:[%s1 + $0x68] sm:$0x3f]
  %v41 = vld [vmem:[%s1 + $0x70] sm:$0x3f]
  %v42 = vld [vmem:[%s2] sm:$0x1f]
  %v44 = vlaneseq
  %v45 = vshrl.u32 %v44, 7
  %v46 = vsub.s32 0, %v45
  %v47 = vrot.slane %v42, %v46
  %v48 = vlaneseq
  %v49 = vshrl.u32 %v48, 7
  %v50 = vsub.s32 1, %v49
  %v51 = vrot.slane %v42, %v50
  %v52 = vlaneseq
  %v53 = vshrl.u32 %v52, 7
  %v54 = vsub.s32 2, %v53
  %v55 = vrot.slane %v42, %v54
  %v56 = vlaneseq
  %v57 = vshrl.u32 %v56, 7
  %v58 = vsub.s32 3, %v57
  %v59 = vrot.slane %v42, %v58
  %v60 = vlaneseq
  %v61 = vshrl.u32 %v60, 7
  %v62 = vsub.s32 4, %v61
  %v63 = vrot.slane %v42, %v62
  %vm69 = vcmask 179200
  %v71 = vsel %vm69, %v26, 0
  %vm73 = vcmask 1045504
  %v75 = vsel %vm73, %v37, 0
  %v78 = vsel %vm73, %v38, 0
  %v81 = vsel %vm73, %v39, 0
  %v84 = vsel %vm73, %v40, 0
  %v87 = vsel %vm73, %v41, 0
  %89 = vmatprep.subr.mxu0 %v28
  %90 = vmatpush1.msra.mxu0 %v27
  %91 = vmatprep.subr.mxu0 %v33
  %92 = vmatpush1.msra.mxu0 %v32
  %93 = vmatprep.subr.mxu0 %v78
  %94 = vmatpush1.msra.mxu0 %v75
  %95 = vmatprep.subr.mxu0 0.0
  %96 = vmatpush1.msra.mxu0 0.0
  %97 = vmatprep.subr.mxu0 0.0
  %98 = vmatpush1.msra.mxu0 0.0
  %99 = vmatprep.subr.mxu0 0.0
  %100 = vmatpush1.msra.mxu0 0.0
  %101 = vmatprep.subr.mxu0 0.0
  %102 = vmatpush1.msra.mxu0 0.0
  %103 = vmatprep.subr.mxu0 0.0
  %104 = vmatpush1.msra.mxu0 0.0
  %105 = vmatprep.subr.mxu0 0.0
  %106 = vmatpush1.msra.mxu0 0.0
  %107 = vmatprep.subr.mxu0 0.0
  %108 = vmatpush1.msra.mxu0 0.0
  %109 = vmatprep.subr.mxu0 0.0
  %110 = vmatpush1.msra.mxu0 0.0
  %111 = vmatprep.subr.mxu0 0.0
  %112 = vmatpush1.msra.mxu0 0.0
  %113 = vmatprep.subr.mxu0 0.0
  %114 = vmatpush1.msra.mxu0 0.0
  %115 = vmatprep.subr.mxu0 0.0
  %116 = vmatpush1.msra.mxu0 0.0
  %117 = vmatprep.subr.mxu0 0.0
  %118 = vmatpush1.msra.mxu0 0.0
  %119 = vmatprep.subr.mxu0 0.0
  %120 = vmatpush1.msra.mxu0 0.0
  %121 = vmatprep.subr.mxu0 0.0
  %122 = vmatpush1.msra.mxu0 0.0
  %123 = vmatprep.subr.mxu0 0.0
  %124 = vmatpush1.msra.mxu0 0.0
  %125 = vmatprep.subr.mxu0 0.0
  %126 = vmatpush1.msra.mxu0 0.0
  %127 = vmatprep.subr.mxu0 0.0
  %128 = vmatpush1.msra.mxu0 0.0
  %129 = vmatprep.subr.mxu0 0.0
  %130 = vmatpush1.msra.mxu0 0.0
  %131 = vmatprep.subr.mxu0 0.0
  %132 = vmatpush1.msra.mxu0 0.0
  %133 = vmatprep.subr.mxu0 0.0
  %134 = vmatpush1.msra.mxu0 0.0
  %135 = vmatprep.subr.mxu0 0.0
  %136 = vmatpush1.msra.mxu0 0.0
  %137 = vmatprep.subr.mxu0 0.0
  %138 = vmatpush1.msra.mxu0 0.0
  %139 = vmatprep.subr.mxu0 0.0
  %140 = vmatpush1.msra.mxu0 0.0
  %141 = vmatprep.subr.mxu0 0.0
  %142 = vmatpush1.msra.mxu0 0.0
  %143 = vmatprep.subr.mxu0 0.0
  %144 = vmatpush1.msra.mxu0 0.0
  %145 = vmatprep.subr.mxu0 0.0
  %146 = vmatpush1.msra.mxu0 0.0
  %147 = vmatprep.subr.mxu0 0.0
  %148 = vmatpush1.msra.mxu0 0.0
  %149 = vmatprep.subr.mxu0 0.0
  %150 = vmatpush1.msra.mxu0 0.0
  %151 = vmatprep.subr.mxu0 0.0
  %152 = vmatpush1.msra.mxu0 0.0
  %153 = vmatprep.mubr.f32.mxu0 0.0
  %154 = vmatmul.mubr.f32.gmra.mrb[0].mxu0 %v71
  %v155 = vpop.f32.mrb[0].mxu0
  %v156 = vadd.f32 %v47, %v155
  %v157 = vpop.f32.mrb[0].mxu0
  %v158 = vadd.f32 %v51, %v157
  %159 = vdwg.mxu0
  %160 = vmatprep.subr.mxu0 %v30
  %161 = vmatpush1.msra.mxu0 %v29
  %162 = vmatprep.subr.mxu0 %v35
  %163 = vmatpush1.msra.mxu0 %v34
  %164 = vmatprep.subr.mxu0 %v84
  %165 = vmatpush1.msra.mxu0 %v81
  %166 = vmatprep.subr.mxu0 0.0
  %167 = vmatpush1.msra.mxu0 0.0
  %168 = vmatprep.subr.mxu0 0.0
  %169 = vmatpush1.msra.mxu0 0.0
  %170 = vmatprep.subr.mxu0 0.0
  %171 = vmatpush1.msra.mxu0 0.0
  %172 = vmatprep.subr.mxu0 0.0
  %173 = vmatpush1.msra.mxu0 0.0
  %174 = vmatprep.subr.mxu0 0.0
  %175 = vmatpush1.msra.mxu0 0.0
  %176 = vmatprep.subr.mxu0 0.0
  %177 = vmatpush1.msra.mxu0 0.0
  %178 = vmatprep.subr.mxu0 0.0
  %179 = vmatpush1.msra.mxu0 0.0
  %180 = vmatprep.subr.mxu0 0.0
  %181 = vmatpush1.msra.mxu0 0.0
  %182 = vmatprep.subr.mxu0 0.0
  %183 = vmatpush1.msra.mxu0 0.0
  %184 = vmatprep.subr.mxu0 0.0
  %185 = vmatpush1.msra.mxu0 0.0
  %186 = vmatprep.subr.mxu0 0.0
  %187 = vmatpush1.msra.mxu0 0.0
  %188 = vmatprep.subr.mxu0 0.0
  %189 = vmatpush1.msra.mxu0 0.0
  %190 = vmatprep.subr.mxu0 0.0
  %191 = vmatpush1.msra.mxu0 0.0
  %192 = vmatprep.subr.mxu0 0.0
  %193 = vmatpush1.msra.mxu0 0.0
  %194 = vmatprep.subr.mxu0 0.0
  %195 = vmatpush1.msra.mxu0 0.0
  %196 = vmatprep.subr.mxu0 0.0
  %197 = vmatpush1.msra.mxu0 0.0
  %198 = vmatprep.subr.mxu0 0.0
  %199 = vmatpush1.msra.mxu0 0.0
  %200 = vmatprep.subr.mxu0 0.0
  %201 = vmatpush1.msra.mxu0 0.0
  %202 = vmatprep.subr.mxu0 0.0
  %203 = vmatpush1.msra.mxu0 0.0
  %204 = vmatprep.subr.mxu0 0.0
  %205 = vmatpush1.msra.mxu0 0.0
  %206 = vmatprep.subr.mxu0 0.0
  %207 = vmatpush1.msra.mxu0 0.0
  %208 = vmatprep.subr.mxu0 0.0
  %209 = vmatpush1.msra.mxu0 0.0
  %210 = vmatprep.subr.mxu0 0.0
  %211 = vmatpush1.msra.mxu0 0.0
  %212 = vmatprep.subr.mxu0 0.0
  %213 = vmatpush1.msra.mxu0 0.0
  %214 = vmatprep.subr.mxu0 0.0
  %215 = vmatpush1.msra.mxu0 0.0
  %216 = vmatprep.subr.mxu0 0.0
  %217 = vmatpush1.msra.mxu0 0.0
  %218 = vmatprep.subr.mxu0 0.0
  %219 = vmatpush1.msra.mxu0 0.0
  %220 = vmatprep.subr.mxu0 0.0
  %221 = vmatpush1.msra.mxu0 0.0
  %222 = vmatprep.subr.mxu0 0.0
  %223 = vmatpush1.msra.mxu0 0.0
  %224 = vmatprep.mubr.f32.mxu0 0.0
  %225 = vmatmul.mubr.f32.gmra.mrb[0].mxu0 %v71
  %v226 = vpop.f32.mrb[0].mxu0
  %v227 = vadd.f32 %v55, %v226
  %v228 = vpop.f32.mrb[0].mxu0
  %v229 = vadd.f32 %v59, %v228
  %230 = vdwg.mxu0
  %231 = vmatprep.subr.mxu0 0.0
  %232 = vmatpush1.msra.mxu0 %v31
  %233 = vmatprep.subr.mxu0 0.0
  %234 = vmatpush1.msra.mxu0 %v36
  %235 = vmatprep.subr.mxu0 0.0
  %236 = vmatpush1.msra.mxu0 %v87
  %237 = vmatprep.subr.mxu0 0.0
  %238 = vmatpush1.msra.mxu0 0.0
  %239 = vmatprep.subr.mxu0 0.0
  %240 = vmatpush1.msra.mxu0 0.0
  %241 = vmatprep.subr.mxu0 0.0
  %242 = vmatpush1.msra.mxu0 0.0
  %243 = vmatprep.subr.mxu0 0.0
  %244 = vmatpush1.msra.mxu0 0.0
  %245 = vmatprep.subr.mxu0 0.0
  %246 = vmatpush1.msra.mxu0 0.0
  %247 = vmatprep.subr.mxu0 0.0
  %248 = vmatpush1.msra.mxu0 0.0
  %249 = vmatprep.subr.mxu0 0.0
  %250 = vmatpush1.msra.mxu0 0.0
  %251 = vmatprep.subr.mxu0 0.0
  %252 = vmatpush1.msra.mxu0 0.0
  %253 = vmatprep.subr.mxu0 0.0
  %254 = vmatpush1.msra.mxu0 0.0
  %255 = vmatprep.subr.mxu0 0.0
  %256 = vmatpush1.msra.mxu0 0.0
  %257 = vmatprep.subr.mxu0 0.0
  %258 = vmatpush1.msra.mxu0 0.0
  %259 = vmatprep.subr.mxu0 0.0
  %260 = vmatpush1.msra.mxu0 0.0
  %261 = vmatprep.subr.mxu0 0.0
  %262 = vmatpush1.msra.mxu0 0.0
  %263 = vmatprep.subr.mxu0 0.0
  %264 = vmatpush1.msra.mxu0 0.0
  %265 = vmatprep.subr.mxu0 0.0
  %266 = vmatpush1.msra.mxu0 0.0
  %267 = vmatprep.subr.mxu0 0.0
  %268 = vmatpush1.msra.mxu0 0.0
  %269 = vmatprep.subr.mxu0 0.0
  %270 = vmatpush1.msra.mxu0 0.0
  %271 = vmatprep.subr.mxu0 0.0
  %272 = vmatpush1.msra.mxu0 0.0
  %273 = vmatprep.subr.mxu0 0.0
  %274 = vmatpush1.msra.mxu0 0.0
  %275 = vmatprep.subr.mxu0 0.0
  %276 = vmatpush1.msra.mxu0 0.0
  %277 = vmatprep.subr.mxu0 0.0
  %278 = vmatpush1.msra.mxu0 0.0
  %279 = vmatprep.subr.mxu0 0.0
  %280 = vmatpush1.msra.mxu0 0.0
  %281 = vmatprep.subr.mxu0 0.0
  %282 = vmatpush1.msra.mxu0 0.0
  %283 = vmatprep.subr.mxu0 0.0
  %284 = vmatpush1.msra.mxu0 0.0
  %285 = vmatprep.subr.mxu0 0.0
  %286 = vmatpush1.msra.mxu0 0.0
  %287 = vmatprep.subr.mxu0 0.0
  %288 = vmatpush1.msra.mxu0 0.0
  %289 = vmatprep.subr.mxu0 0.0
  %290 = vmatpush1.msra.mxu0 0.0
  %291 = vmatprep.subr.mxu0 0.0
  %292 = vmatpush1.msra.mxu0 0.0
  %293 = vmatprep.subr.mxu0 0.0
  %294 = vmatpush1.msra.mxu0 0.0
  %295 = vmatprep.mubr.f32.mxu0 0.0
  %296 = vmatmul.mubr.f32.gmra.mrb[0].mxu0 %v71
  %v297 = vpop.f32.mrb[0].mxu0
  %v298 = vadd.f32 %v63, %v297
  %v299 = vpop.f32.mrb[0].mxu0
  %300 = vdwg.mxu0
  %v301 = vxor.u32 %v156, 2147483648
  %v302 = vxor.u32 %v158, 2147483648
  %v303 = vxor.u32 %v227, 2147483648
  %v304 = vxor.u32 %v229, 2147483648
  %v305 = vxor.u32 %v298, 2147483648
  %v306 = vmul.f32 %v301, 1.442695
  %v307 = vpow.pop %v306
  %v308 = vmul.f32 %v302, 1.442695
  %v309 = vpow.pop %v308
  %v310 = vmul.f32 %v303, 1.442695
  %v311 = vpow.pop %v310
  %v312 = vmul.f32 %v304, 1.442695
  %v313 = vpow.pop %v312
  %v314 = vmul.f32 %v305, 1.442695
  %v315 = vpow.pop %v314
  %v316 = vadd.f32 %v307, 1.0
  %v317 = vadd.f32 %v309, 1.0
  %v318 = vadd.f32 %v311, 1.0
  %v319 = vadd.f32 %v313, 1.0
  %v320 = vadd.f32 %v315, 1.0
  %v321 = vrcp.pop %v316
  %v322 = vmul.f32 1.0, %v321
  %v323 = vrcp.pop %v317
  %v324 = vmul.f32 1.0, %v323
  %v325 = vrcp.pop %v318
  %v326 = vmul.f32 1.0, %v325
  %v327 = vrcp.pop %v319
  %v328 = vmul.f32 1.0, %v327
  %v329 = vrcp.pop %v320
  %v330 = vmul.f32 1.0, %v329
  %v331 = vld [vmem:[%s3] sm:$0xff]
  %v332 = vld [vmem:[%s3 + $0x8] sm:$0xff]
  %v333 = vld [vmem:[%s3 + $0x10] sm:$0xff]
  %v334 = vld [vmem:[%s3 + $0x18] sm:$0xff]
  %v335 = vld [vmem:[%s3 + $0x20] sm:$0xff]
  %v336 = vld [vmem:[%s3 + $0x28] sm:$0xff]
  %v337 = vld [vmem:[%s3 + $0x30] sm:$0xff]
  %v338 = vld [vmem:[%s3 + $0x38] sm:$0xff]
  %v339 = vld [vmem:[%s3 + $0x40] sm:$0xff]
  %v340 = vld [vmem:[%s3 + $0x48] sm:$0xff]
  %v341 = vld [vmem:[%s3 + $0x50] sm:$0xff]
  %v342 = vld [vmem:[%s3 + $0x58] sm:$0xff]
  %v343 = vld [vmem:[%s3 + $0x60] sm:$0xff]
  %v344 = vld [vmem:[%s3 + $0x68] sm:$0xff]
  %v345 = vld [vmem:[%s3 + $0x70] sm:$0xff]
  %v346 = vld [vmem:[%s3 + $0x78] sm:$0xff]
  %v347 = vld [vmem:[%s3 + $0x80] sm:$0xff]
  %v348 = vld [vmem:[%s3 + $0x88] sm:$0xff]
  %v349 = vld [vmem:[%s3 + $0x90] sm:$0xff]
  %v350 = vld [vmem:[%s3 + $0x98] sm:$0xff]
  %v351 = vld [vmem:[%s3 + $0xa0] sm:$0xff]
  %v352 = vld [vmem:[%s3 + $0xa8] sm:$0xff]
  %v353 = vld [vmem:[%s3 + $0xb0] sm:$0xff]
  %v354 = vld [vmem:[%s3 + $0xb8] sm:$0xff]
  %v355 = vld [vmem:[%s3 + $0xc0] sm:$0xff]
  %v356 = vld [vmem:[%s3 + $0xc8] sm:$0xff]
  %v357 = vld [vmem:[%s3 + $0xd0] sm:$0xff]
  %v358 = vld [vmem:[%s3 + $0xd8] sm:$0xff]
  %v359 = vld [vmem:[%s3 + $0xe0] sm:$0xff]
  %v360 = vld [vmem:[%s3 + $0xe8] sm:$0xff]
  %v361 = vld [vmem:[%s3 + $0xf0] sm:$0xff]
  %v362 = vld [vmem:[%s3 + $0xf8] sm:$0xff]
  %v363 = vld [vmem:[%s3 + $0x100] sm:$0xff]
  %v364 = vld [vmem:[%s3 + $0x108] sm:$0xff]
  %v365 = vld [vmem:[%s3 + $0x110] sm:$0xff]
  %v366 = vld [vmem:[%s3 + $0x118] sm:$0xff]
  %v367 = vld [vmem:[%s3 + $0x120] sm:$0xff]
  %v368 = vld [vmem:[%s3 + $0x128] sm:$0xff]
  %v369 = vld [vmem:[%s3 + $0x130] sm:$0xff]
  %v370 = vld [vmem:[%s3 + $0x138] sm:$0xff]
  %v371 = vld [vmem:[%s3 + $0x140] sm:$0xff]
  %v372 = vld [vmem:[%s3 + $0x148] sm:$0xff]
  %v373 = vld [vmem:[%s3 + $0x150] sm:$0xff]
  %v374 = vld [vmem:[%s3 + $0x158] sm:$0xff]
  %v375 = vld [vmem:[%s3 + $0x160] sm:$0xff]
  %v376 = vld [vmem:[%s3 + $0x168] sm:$0xff]
  %v377 = vld [vmem:[%s3 + $0x170] sm:$0xff]
  %v378 = vld [vmem:[%s3 + $0x178] sm:$0xff]
  %v379 = vld [vmem:[%s3 + $0x180] sm:$0xff]
  %v380 = vld [vmem:[%s3 + $0x188] sm:$0xff]
  %v381 = vld [vmem:[%s3 + $0x190] sm:$0xff]
  %v382 = vld [vmem:[%s3 + $0x198] sm:$0xff]
  %v383 = vld [vmem:[%s3 + $0x1a0] sm:$0xff]
  %v384 = vld [vmem:[%s3 + $0x1a8] sm:$0xff]
  %v385 = vld [vmem:[%s3 + $0x1b0] sm:$0xff]
  %v386 = vlaneseq
  %v387 = vshrl.u32 %v386, 7
  %v388 = vsub.s32 0, %v387
  %v389 = vrot.slane %v322, %v388
  %v390 = vlaneseq
  %v391 = vshrl.u32 %v390, 7
  %v392 = vsub.s32 0, %v391
  %v393 = vrot.slane %v324, %v392
  %v394 = vlaneseq
  %v395 = vshrl.u32 %v394, 7
  %v396 = vsub.s32 0, %v395
  %v397 = vrot.slane %v326, %v396
  %v398 = vlaneseq
  %v399 = vshrl.u32 %v398, 7
  %v400 = vsub.s32 0, %v399
  %v401 = vrot.slane %v328, %v400
  %v402 = vlaneseq
  %v403 = vshrl.u32 %v402, 7
  %v404 = vsub.s32 0, %v403
  %v405 = vrot.slane %v330, %v404
  %v406 = vmul.f32 %v331, %v389
  %v407 = vmul.f32 %v332, %v393
  %v408 = vmul.f32 %v333, %v397
  %v409 = vmul.f32 %v334, %v401
  %v410 = vmul.f32 %v335, %v405
  %v411 = vmul.f32 %v336, %v389
  %v412 = vmul.f32 %v337, %v393
  %v413 = vmul.f32 %v338, %v397
  %v414 = vmul.f32 %v339, %v401
  %v415 = vmul.f32 %v340, %v405
  %v416 = vmul.f32 %v341, %v389
  %v417 = vmul.f32 %v342, %v393
  %v418 = vmul.f32 %v343, %v397
  %v419 = vmul.f32 %v344, %v401
  %v420 = vmul.f32 %v345, %v405
  %v421 = vmul.f32 %v346, %v389
  %v422 = vmul.f32 %v347, %v393
  %v423 = vmul.f32 %v348, %v397
  %v424 = vmul.f32 %v349, %v401
  %v425 = vmul.f32 %v350, %v405
  %v426 = vmul.f32 %v351, %v389
  %v427 = vmul.f32 %v352, %v393
  %v428 = vmul.f32 %v353, %v397
  %v429 = vmul.f32 %v354, %v401
  %v430 = vmul.f32 %v355, %v405
  %v431 = vmul.f32 %v356, %v389
  %v432 = vmul.f32 %v357, %v393
  %v433 = vmul.f32 %v358, %v397
  %v434 = vmul.f32 %v359, %v401
  %v435 = vmul.f32 %v360, %v405
  %v436 = vmul.f32 %v361, %v389
  %v437 = vmul.f32 %v362, %v393
  %v438 = vmul.f32 %v363, %v397
  %v439 = vmul.f32 %v364, %v401
  %v440 = vmul.f32 %v365, %v405
  %v441 = vmul.f32 %v366, %v389
  %v442 = vmul.f32 %v367, %v393
  %v443 = vmul.f32 %v368, %v397
  %v444 = vmul.f32 %v369, %v401
  %v445 = vmul.f32 %v370, %v405
  %v446 = vmul.f32 %v371, %v389
  %v447 = vmul.f32 %v372, %v393
  %v448 = vmul.f32 %v373, %v397
  %v449 = vmul.f32 %v374, %v401
  %v450 = vmul.f32 %v375, %v405
  %v451 = vmul.f32 %v376, %v389
  %v452 = vmul.f32 %v377, %v393
  %v453 = vmul.f32 %v378, %v397
  %v454 = vmul.f32 %v379, %v401
  %v455 = vmul.f32 %v380, %v405
  %v456 = vmul.f32 %v381, %v389
  %v457 = vmul.f32 %v382, %v393
  %v458 = vmul.f32 %v383, %v397
  %v459 = vmul.f32 %v384, %v401
  %v460 = vmul.f32 %v385, %v405
  %v461 = vld [vmem:[%s4] sm:$0xff]
  %v462 = vld [vmem:[%s4 + $0x8] sm:$0xff]
  %v463 = vld [vmem:[%s4 + $0x10] sm:$0xff]
  %v464 = vld [vmem:[%s4 + $0x18] sm:$0xff]
  %v465 = vld [vmem:[%s4 + $0x20] sm:$0xff]
  %v466 = vld [vmem:[%s4 + $0x28] sm:$0xff]
  %v467 = vld [vmem:[%s4 + $0x30] sm:$0xff]
  %v468 = vld [vmem:[%s4 + $0x38] sm:$0xff]
  %v469 = vld [vmem:[%s4 + $0x40] sm:$0xff]
  %v470 = vld [vmem:[%s4 + $0x48] sm:$0xff]
  %v471 = vld [vmem:[%s4 + $0x50] sm:$0xff]
  %v472 = vld [vmem:[%s4 + $0x58] sm:$0xff]
  %v473 = vld [vmem:[%s4 + $0x60] sm:$0xff]
  %v474 = vld [vmem:[%s4 + $0x68] sm:$0xff]
  %v475 = vld [vmem:[%s4 + $0x70] sm:$0xff]
  %v476 = vld [vmem:[%s4 + $0x78] sm:$0xff]
  %v477 = vld [vmem:[%s4 + $0x80] sm:$0xff]
  %v478 = vld [vmem:[%s4 + $0x88] sm:$0xff]
  %v479 = vld [vmem:[%s4 + $0x90] sm:$0xff]
  %v480 = vld [vmem:[%s4 + $0x98] sm:$0xff]
  %v481 = vld [vmem:[%s4 + $0xa0] sm:$0xff]
  %v482 = vld [vmem:[%s4 + $0xa8] sm:$0xff]
  %v483 = vld [vmem:[%s4 + $0xb0] sm:$0xff]
  %v484 = vld [vmem:[%s4 + $0xb8] sm:$0xff]
  %v485 = vld [vmem:[%s4 + $0xc0] sm:$0xff]
  %v486 = vld [vmem:[%s4 + $0xc8] sm:$0xff]
  %v487 = vld [vmem:[%s4 + $0xd0] sm:$0xff]
  %v488 = vld [vmem:[%s4 + $0xd8] sm:$0xff]
  %v489 = vld [vmem:[%s4 + $0xe0] sm:$0xff]
  %v490 = vld [vmem:[%s4 + $0xe8] sm:$0xff]
  %v491 = vld [vmem:[%s4 + $0xf0] sm:$0xff]
  %v492 = vld [vmem:[%s4 + $0xf8] sm:$0xff]
  %v493 = vld [vmem:[%s4 + $0x100] sm:$0xff]
  %v494 = vld [vmem:[%s4 + $0x108] sm:$0xff]
  %v495 = vld [vmem:[%s4 + $0x110] sm:$0xff]
  %v496 = vld [vmem:[%s4 + $0x118] sm:$0xff]
  %v497 = vld [vmem:[%s4 + $0x120] sm:$0xff]
  %v498 = vld [vmem:[%s4 + $0x128] sm:$0xff]
  %v499 = vld [vmem:[%s4 + $0x130] sm:$0xff]
  %v500 = vld [vmem:[%s4 + $0x138] sm:$0xff]
  %v501 = vld [vmem:[%s4 + $0x140] sm:$0xff]
  %v502 = vld [vmem:[%s4 + $0x148] sm:$0xff]
  %v503 = vld [vmem:[%s4 + $0x150] sm:$0xff]
  %v504 = vld [vmem:[%s4 + $0x158] sm:$0xff]
  %v505 = vld [vmem:[%s4 + $0x160] sm:$0xff]
  %v506 = vld [vmem:[%s4 + $0x168] sm:$0xff]
  %v507 = vld [vmem:[%s4 + $0x170] sm:$0xff]
  %v508 = vld [vmem:[%s4 + $0x178] sm:$0xff]
  %v509 = vld [vmem:[%s4 + $0x180] sm:$0xff]
  %v510 = vld [vmem:[%s4 + $0x188] sm:$0xff]
  %v511 = vld [vmem:[%s4 + $0x190] sm:$0xff]
  %v512 = vld [vmem:[%s4 + $0x198] sm:$0xff]
  %v513 = vld [vmem:[%s4 + $0x1a0] sm:$0xff]
  %v514 = vld [vmem:[%s4 + $0x1a8] sm:$0xff]
  %v515 = vld [vmem:[%s4 + $0x1b0] sm:$0xff]
  %v516 = vld [vmem:[%s4 + $0x1b8] sm:$0xff]
  %v517 = vld [vmem:[%s4 + $0x1c0] sm:$0xff]
  %v518 = vld [vmem:[%s4 + $0x1c8] sm:$0xff]
  %v519 = vld [vmem:[%s4 + $0x1d0] sm:$0xff]
  %v520 = vld [vmem:[%s4 + $0x1d8] sm:$0xff]
  %v521 = vld [vmem:[%s4 + $0x1e0] sm:$0xff]
  %v522 = vld [vmem:[%s4 + $0x1e8] sm:$0xff]
  %v523 = vld [vmem:[%s4 + $0x1f0] sm:$0xff]
  %v524 = vld [vmem:[%s4 + $0x1f8] sm:$0xff]
  %v525 = vld [vmem:[%s4 + $0x200] sm:$0xff]
  %v526 = vld [vmem:[%s4 + $0x208] sm:$0xff]
  %v527 = vld [vmem:[%s4 + $0x210] sm:$0xff]
  %v528 = vld [vmem:[%s4 + $0x218] sm:$0xff]
  %v529 = vld [vmem:[%s4 + $0x220] sm:$0xff]
  %v530 = vld [vmem:[%s4 + $0x228] sm:$0xff]
  %v531 = vld [vmem:[%s4 + $0x230] sm:$0xff]
  %v532 = vld [vmem:[%s4 + $0x238] sm:$0xff]
  %v533 = vld [vmem:[%s4 + $0x240] sm:$0xff]
  %v534 = vld [vmem:[%s4 + $0x248] sm:$0xff]
  %v535 = vld [vmem:[%s4 + $0x250] sm:$0xff]
  %v536 = vld [vmem:[%s4 + $0x258] sm:$0xff]
  %v537 = vld [vmem:[%s4 + $0x260] sm:$0xff]
  %v538 = vld [vmem:[%s4 + $0x268] sm:$0xff]
  %v539 = vld [vmem:[%s4 + $0x270] sm:$0xff]
  %v540 = vld [vmem:[%s4 + $0x278] sm:$0xff]
  %v541 = vld [vmem:[%s4 + $0x280] sm:$0xff]
  %v542 = vld [vmem:[%s4 + $0x288] sm:$0xff]
  %v543 = vld [vmem:[%s4 + $0x290] sm:$0xff]
  %v544 = vld [vmem:[%s4 + $0x298] sm:$0xff]
  %v545 = vld [vmem:[%s4 + $0x2a0] sm:$0xff]
  %v546 = vld [vmem:[%s4 + $0x2a8] sm:$0xff]
  %v547 = vld [vmem:[%s4 + $0x2b0] sm:$0xff]
  %v548 = vld [vmem:[%s4 + $0x2b8] sm:$0xff]
  %v549 = vld [vmem:[%s4 + $0x2c0] sm:$0xff]
  %v550 = vld [vmem:[%s4 + $0x2c8] sm:$0xff]
  %v551 = vld [vmem:[%s4 + $0x2d0] sm:$0xff]
  %v552 = vld [vmem:[%s4 + $0x2d8] sm:$0xff]
  %v553 = vld [vmem:[%s4 + $0x2e0] sm:$0xff]
  %v554 = vld [vmem:[%s4 + $0x2e8] sm:$0xff]
  %v555 = vld [vmem:[%s4 + $0x2f0] sm:$0xff]
  %v556 = vld [vmem:[%s4 + $0x2f8] sm:$0xff]
  %v557 = vld [vmem:[%s4 + $0x300] sm:$0xff]
  %v558 = vld [vmem:[%s4 + $0x308] sm:$0xff]
  %v559 = vld [vmem:[%s4 + $0x310] sm:$0xff]
  %v560 = vld [vmem:[%s4 + $0x318] sm:$0xff]
  %v561 = vld [vmem:[%s4 + $0x320] sm:$0xff]
  %v562 = vld [vmem:[%s4 + $0x328] sm:$0xff]
  %v563 = vld [vmem:[%s4 + $0x330] sm:$0xff]
  %v564 = vld [vmem:[%s4 + $0x338] sm:$0xff]
  %v565 = vld [vmem:[%s4 + $0x340] sm:$0xff]
  %v566 = vld [vmem:[%s4 + $0x348] sm:$0xff]
  %v567 = vld [vmem:[%s4 + $0x350] sm:$0xff]
  %v568 = vld [vmem:[%s4 + $0x358] sm:$0xff]
  %v569 = vld [vmem:[%s4 + $0x360] sm:$0xff]
  %v570 = vld [vmem:[%s4 + $0x368] sm:$0xff]
  %v571 = vld [vmem:[%s4 + $0x370] sm:$0xff]
  %v572 = vld [vmem:[%s4 + $0x378] sm:$0xff]
  %v573 = vld [vmem:[%s4 + $0x380] sm:$0xff]
  %v574 = vld [vmem:[%s4 + $0x388] sm:$0xff]
  %v575 = vld [vmem:[%s4 + $0x390] sm:$0xff]
  %v576 = vld [vmem:[%s4 + $0x398] sm:$0xff]
  %v577 = vld [vmem:[%s4 + $0x3a0] sm:$0xff]
  %v578 = vld [vmem:[%s4 + $0x3a8] sm:$0xff]
  %v579 = vld [vmem:[%s4 + $0x3b0] sm:$0xff]
  %v580 = vld [vmem:[%s4 + $0x3b8] sm:$0xff]
  %v581 = vld [vmem:[%s4 + $0x3c0] sm:$0xff]
  %v582 = vld [vmem:[%s4 + $0x3c8] sm:$0xff]
  %v583 = vld [vmem:[%s4 + $0x3d0] sm:$0xff]
  %v584 = vld [vmem:[%s4 + $0x3d8] sm:$0xff]
  %v585 = vld [vmem:[%s4 + $0x3e0] sm:$0xff]
  %v586 = vld [vmem:[%s4 + $0x3e8] sm:$0xff]
  %v587 = vld [vmem:[%s4 + $0x3f0] sm:$0xff]
  %v588 = vld [vmem:[%s4 + $0x3f8] sm:$0xff]
  %v589 = vld [vmem:[%s4 + $0x400] sm:$0xff]
  %v590 = vld [vmem:[%s4 + $0x408] sm:$0xff]
  %v591 = vld [vmem:[%s4 + $0x410] sm:$0xff]
  %v592 = vld [vmem:[%s4 + $0x418] sm:$0xff]
  %vm593 = vcmask 130048
  %v595 = vsel %vm593, %v410, 0
  %v598 = vsel %vm593, %v415, 0
  %v601 = vsel %vm593, %v420, 0
  %v604 = vsel %vm593, %v425, 0
  %v607 = vsel %vm593, %v430, 0
  %v610 = vsel %vm593, %v435, 0
  %v613 = vsel %vm593, %v440, 0
  %v616 = vsel %vm593, %v445, 0
  %v619 = vsel %vm593, %v450, 0
  %v622 = vsel %vm593, %v455, 0
  %v625 = vsel %vm593, %v460, 0
  %627 = vmatprep.subr.mxu0 %v462
  %628 = vmatpush1.msra.mxu0 %v461
  %629 = vmatprep.subr.mxu0 %v464
  %630 = vmatpush1.msra.mxu0 %v463
  %631 = vmatprep.subr.mxu0 %v466
  %632 = vmatpush1.msra.mxu0 %v465
  %633 = vmatprep.subr.mxu0 %v468
  %634 = vmatpush1.msra.mxu0 %v467
  %635 = vmatprep.subr.mxu0 %v470
  %636 = vmatpush1.msra.mxu0 %v469
  %637 = vmatprep.subr.mxu0 %v472
  %638 = vmatpush1.msra.mxu0 %v471
  %639 = vmatprep.subr.mxu0 %v474
  %640 = vmatpush1.msra.mxu0 %v473
  %641 = vmatprep.subr.mxu0 %v476
  %642 = vmatpush1.msra.mxu0 %v475
  %643 = vmatprep.subr.mxu0 %v478
  %644 = vmatpush1.msra.mxu0 %v477
  %645 = vmatprep.subr.mxu0 %v480
  %646 = vmatpush1.msra.mxu0 %v479
  %647 = vmatprep.subr.mxu0 %v482
  %648 = vmatpush1.msra.mxu0 %v481
  %649 = vmatprep.subr.mxu0 %v484
  %650 = vmatpush1.msra.mxu0 %v483
  %651 = vmatprep.subr.mxu0 %v486
  %652 = vmatpush1.msra.mxu0 %v485
  %653 = vmatprep.subr.mxu0 %v488
  %654 = vmatpush1.msra.mxu0 %v487
  %655 = vmatprep.subr.mxu0 %v490
  %656 = vmatpush1.msra.mxu0 %v489
  %657 = vmatprep.subr.mxu0 %v492
  %658 = vmatpush1.msra.mxu0 %v491
  %659 = vmatprep.subr.mxu0 %v494
  %660 = vmatpush1.msra.mxu0 %v493
  %661 = vmatprep.subr.mxu0 %v496
  %662 = vmatpush1.msra.mxu0 %v495
  %663 = vmatprep.subr.mxu0 %v498
  %664 = vmatpush1.msra.mxu0 %v497
  %665 = vmatprep.subr.mxu0 %v500
  %666 = vmatpush1.msra.mxu0 %v499
  %667 = vmatprep.subr.mxu0 %v502
  %668 = vmatpush1.msra.mxu0 %v501
  %669 = vmatprep.subr.mxu0 %v504
  %670 = vmatpush1.msra.mxu0 %v503
  %671 = vmatprep.subr.mxu0 %v506
  %672 = vmatpush1.msra.mxu0 %v505
  %673 = vmatprep.subr.mxu0 %v508
  %674 = vmatpush1.msra.mxu0 %v507
  %675 = vmatprep.subr.mxu0 %v510
  %676 = vmatpush1.msra.mxu0 %v509
  %677 = vmatprep.subr.mxu0 %v512
  %678 = vmatpush1.msra.mxu0 %v511
  %679 = vmatprep.subr.mxu0 %v514
  %680 = vmatpush1.msra.mxu0 %v513
  %681 = vmatprep.subr.mxu0 %v516
  %682 = vmatpush1.msra.mxu0 %v515
  %683 = vmatprep.subr.mxu0 %v518
  %684 = vmatpush1.msra.mxu0 %v517
  %685 = vmatprep.subr.mxu0 %v520
  %686 = vmatpush1.msra.mxu0 %v519
  %687 = vmatprep.subr.mxu0 %v522
  %688 = vmatpush1.msra.mxu0 %v521
  %689 = vmatprep.subr.mxu0 %v524
  %690 = vmatpush1.msra.mxu0 %v523
  %691 = vmatprep.mubr.f32.mxu0 %v407
  %692 = vmatmul.mubr.f32.gmra.mrb[0].mxu0 %v406
  %v693 = vpop.f32.mrb[0].mxu0
  %v694 = vadd.f32 0.0, %v693
  %v695 = vpop.f32.mrb[0].mxu0
  %v696 = vadd.f32 0.0, %v695
  %697 = vmatprep.mubr.f32.mxu0 %v412
  %698 = vmatmul.mubr.f32.gmra.mrb[0].mxu0 %v411
  %v699 = vpop.f32.mrb[0].mxu0
  %v700 = vadd.f32 0.0, %v699
  %v701 = vpop.f32.mrb[0].mxu0
  %v702 = vadd.f32 0.0, %v701
  %703 = vmatprep.mubr.f32.mxu0 %v417
  %704 = vmatmul.mubr.f32.gmra.mrb[0].mxu0 %v416
  %v705 = vpop.f32.mrb[0].mxu0
  %v706 = vadd.f32 0.0, %v705
  %v707 = vpop.f32.mrb[0].mxu0
  %v708 = vadd.f32 0.0, %v707
  %709 = vmatprep.mubr.f32.mxu0 %v422
  %710 = vmatmul.mubr.f32.gmra.mrb[0].mxu0 %v421
  %v711 = vpop.f32.mrb[0].mxu0
  %v712 = vadd.f32 0.0, %v711
  %v713 = vpop.f32.mrb[0].mxu0
  %v714 = vadd.f32 0.0, %v713
  %715 = vmatprep.mubr.f32.mxu0 %v427
  %716 = vmatmul.mubr.f32.gmra.mrb[0].mxu0 %v426
  %v717 = vpop.f32.mrb[0].mxu0
  %v718 = vadd.f32 0.0, %v717
  %v719 = vpop.f32.mrb[0].mxu0
  %v720 = vadd.f32 0.0, %v719
  %721 = vmatprep.mubr.f32.mxu0 %v432
  %722 = vmatmul.mubr.f32.gmra.mrb[0].mxu0 %v431
  %v723 = vpop.f32.mrb[0].mxu0
  %v724 = vadd.f32 0.0, %v723
  %v725 = vpop.f32.mrb[0].mxu0
  %v726 = vadd.f32 0.0, %v725
  %727 = vmatprep.mubr.f32.mxu0 %v437
  %728 = vmatmul.mubr.f32.gmra.mrb[0].mxu0 %v436
  %v729 = vpop.f32.mrb[0].mxu0
  %v730 = vadd.f32 0.0, %v729
  %v731 = vpop.f32.mrb[0].mxu0
  %v732 = vadd.f32 0.0, %v731
  %733 = vmatprep.mubr.f32.mxu0 %v442
  %734 = vmatmul.mubr.f32.gmra.mrb[0].mxu0 %v441
  %v735 = vpop.f32.mrb[0].mxu0
  %v736 = vadd.f32 0.0, %v735
  %v737 = vpop.f32.mrb[0].mxu0
  %v738 = vadd.f32 0.0, %v737
  %739 = vmatprep.mubr.f32.mxu0 %v447
  %740 = vmatmul.mubr.f32.gmra.mrb[0].mxu0 %v446
  %v741 = vpop.f32.mrb[0].mxu0
  %v742 = vadd.f32 0.0, %v741
  %v743 = vpop.f32.mrb[0].mxu0
  %v744 = vadd.f32 0.0, %v743
  %745 = vmatprep.mubr.f32.mxu0 %v452
  %746 = vmatmul.mubr.f32.gmra.mrb[0].mxu0 %v451
  %v747 = vpop.f32.mrb[0].mxu0
  %v748 = vadd.f32 0.0, %v747
  %v749 = vpop.f32.mrb[0].mxu0
  %v750 = vadd.f32 0.0, %v749
  %751 = vmatprep.mubr.f32.mxu0 %v457
  %752 = vmatmul.mubr.f32.gmra.mrb[0].mxu0 %v456
  %v753 = vpop.f32.mrb[0].mxu0
  %v754 = vadd.f32 0.0, %v753
  %v755 = vpop.f32.mrb[0].mxu0
  %v756 = vadd.f32 0.0, %v755
  %757 = vdwg.mxu0
  %758 = vmatprep.subr.mxu0 %v526
  %759 = vmatpush1.msra.mxu0 %v525
  %760 = vmatprep.subr.mxu0 %v528
  %761 = vmatpush1.msra.mxu0 %v527
  %762 = vmatprep.subr.mxu0 %v530
  %763 = vmatpush1.msra.mxu0 %v529
  %764 = vmatprep.subr.mxu0 %v532
  %765 = vmatpush1.msra.mxu0 %v531
  %766 = vmatprep.subr.mxu0 %v534
  %767 = vmatpush1.msra.mxu0 %v533
  %768 = vmatprep.subr.mxu0 %v536
  %769 = vmatpush1.msra.mxu0 %v535
  %770 = vmatprep.subr.mxu0 %v538
  %771 = vmatpush1.msra.mxu0 %v537
  %772 = vmatprep.subr.mxu0 %v540
  %773 = vmatpush1.msra.mxu0 %v539
  %774 = vmatprep.subr.mxu0 %v542
  %775 = vmatpush1.msra.mxu0 %v541
  %776 = vmatprep.subr.mxu0 %v544
  %777 = vmatpush1.msra.mxu0 %v543
  %778 = vmatprep.subr.mxu0 %v546
  %779 = vmatpush1.msra.mxu0 %v545
  %780 = vmatprep.subr.mxu0 %v548
  %781 = vmatpush1.msra.mxu0 %v547
  %782 = vmatprep.subr.mxu0 %v550
  %783 = vmatpush1.msra.mxu0 %v549
  %784 = vmatprep.subr.mxu0 %v552
  %785 = vmatpush1.msra.mxu0 %v551
  %786 = vmatprep.subr.mxu0 %v554
  %787 = vmatpush1.msra.mxu0 %v553
  %788 = vmatprep.subr.mxu0 %v556
  %789 = vmatpush1.msra.mxu0 %v555
  %790 = vmatprep.subr.mxu0 %v558
  %791 = vmatpush1.msra.mxu0 %v557
  %792 = vmatprep.subr.mxu0 %v560
  %793 = vmatpush1.msra.mxu0 %v559
  %794 = vmatprep.subr.mxu0 %v562
  %795 = vmatpush1.msra.mxu0 %v561
  %796 = vmatprep.subr.mxu0 %v564
  %797 = vmatpush1.msra.mxu0 %v563
  %798 = vmatprep.subr.mxu0 %v566
  %799 = vmatpush1.msra.mxu0 %v565
  %800 = vmatprep.subr.mxu0 %v568
  %801 = vmatpush1.msra.mxu0 %v567
  %802 = vmatprep.subr.mxu0 %v570
  %803 = vmatpush1.msra.mxu0 %v569
  %804 = vmatprep.subr.mxu0 %v572
  %805 = vmatpush1.msra.mxu0 %v571
  %806 = vmatprep.subr.mxu0 %v574
  %807 = vmatpush1.msra.mxu0 %v573
  %808 = vmatprep.subr.mxu0 %v576
  %809 = vmatpush1.msra.mxu0 %v575
  %810 = vmatprep.subr.mxu0 %v578
  %811 = vmatpush1.msra.mxu0 %v577
  %812 = vmatprep.subr.mxu0 %v580
  %813 = vmatpush1.msra.mxu0 %v579
  %814 = vmatprep.subr.mxu0 %v582
  %815 = vmatpush1.msra.mxu0 %v581
  %816 = vmatprep.subr.mxu0 %v584
  %817 = vmatpush1.msra.mxu0 %v583
  %818 = vmatprep.subr.mxu0 %v586
  %819 = vmatpush1.msra.mxu0 %v585
  %820 = vmatprep.subr.mxu0 %v588
  %821 = vmatpush1.msra.mxu0 %v587
  %822 = vmatprep.mubr.f32.mxu0 %v409
  %823 = vmatmul.mubr.f32.gmra.mrb[0].mxu0 %v408
  %v824 = vpop.f32.mrb[0].mxu0
  %v825 = vadd.f32 %v694, %v824
  %v826 = vpop.f32.mrb[0].mxu0
  %v827 = vadd.f32 %v696, %v826
  %828 = vmatprep.mubr.f32.mxu0 %v414
  %829 = vmatmul.mubr.f32.gmra.mrb[0].mxu0 %v413
  %v830 = vpop.f32.mrb[0].mxu0
  %v831 = vadd.f32 %v700, %v830
  %v832 = vpop.f32.mrb[0].mxu0
  %v833 = vadd.f32 %v702, %v832
  %834 = vmatprep.mubr.f32.mxu0 %v419
  %835 = vmatmul.mubr.f32.gmra.mrb[0].mxu0 %v418
  %v836 = vpop.f32.mrb[0].mxu0
  %v837 = vadd.f32 %v706, %v836
  %v838 = vpop.f32.mrb[0].mxu0
  %v839 = vadd.f32 %v708, %v838
  %840 = vmatprep.mubr.f32.mxu0 %v424
  %841 = vmatmul.mubr.f32.gmra.mrb[0].mxu0 %v423
  %v842 = vpop.f32.mrb[0].mxu0
  %v843 = vadd.f32 %v712, %v842
  %v844 = vpop.f32.mrb[0].mxu0
  %v845 = vadd.f32 %v714, %v844
  %846 = vmatprep.mubr.f32.mxu0 %v429
  %847 = vmatmul.mubr.f32.gmra.mrb[0].mxu0 %v428
  %v848 = vpop.f32.mrb[0].mxu0
  %v849 = vadd.f32 %v718, %v848
  %v850 = vpop.f32.mrb[0].mxu0
  %v851 = vadd.f32 %v720, %v850
  %852 = vmatprep.mubr.f32.mxu0 %v434
  %853 = vmatmul.mubr.f32.gmra.mrb[0].mxu0 %v433
  %v854 = vpop.f32.mrb[0].mxu0
  %v855 = vadd.f32 %v724, %v854
  %v856 = vpop.f32.mrb[0].mxu0
  %v857 = vadd.f32 %v726, %v856
  %858 = vmatprep.mubr.f32.mxu0 %v439
  %859 = vmatmul.mubr.f32.gmra.mrb[0].mxu0 %v438
  %v860 = vpop.f32.mrb[0].mxu0
  %v861 = vadd.f32 %v730, %v860
  %v862 = vpop.f32.mrb[0].mxu0
  %v863 = vadd.f32 %v732, %v862
  %864 = vmatprep.mubr.f32.mxu0 %v444
  %865 = vmatmul.mubr.f32.gmra.mrb[0].mxu0 %v443
  %v866 = vpop.f32.mrb[0].mxu0
  %v867 = vadd.f32 %v736, %v866
  %v868 = vpop.f32.mrb[0].mxu0
  %v869 = vadd.f32 %v738, %v868
  %870 = vmatprep.mubr.f32.mxu0 %v449
  %871 = vmatmul.mubr.f32.gmra.mrb[0].mxu0 %v448
  %v872 = vpop.f32.mrb[0].mxu0
  %v873 = vadd.f32 %v742, %v872
  %v874 = vpop.f32.mrb[0].mxu0
  %v875 = vadd.f32 %v744, %v874
  %876 = vmatprep.mubr.f32.mxu0 %v454
  %877 = vmatmul.mubr.f32.gmra.mrb[0].mxu0 %v453
  %v878 = vpop.f32.mrb[0].mxu0
  %v879 = vadd.f32 %v748, %v878
  %v880 = vpop.f32.mrb[0].mxu0
  %v881 = vadd.f32 %v750, %v880
  %882 = vmatprep.mubr.f32.mxu0 %v459
  %883 = vmatmul.mubr.f32.gmra.mrb[0].mxu0 %v458
  %v884 = vpop.f32.mrb[0].mxu0
  %v885 = vadd.f32 %v754, %v884
  %v886 = vpop.f32.mrb[0].mxu0
  %v887 = vadd.f32 %v756, %v886
  %888 = vdwg.mxu0
  %889 = vmatprep.subr.mxu0 %v590
  %890 = vmatpush1.msra.mxu0 %v589
  %891 = vmatprep.subr.mxu0 %v592
  %892 = vmatpush1.msra.mxu0 %v591
  %893 = vmatprep.subr.mxu0 0.0
  %894 = vmatpush1.msra.mxu0 0.0
  %895 = vmatprep.subr.mxu0 0.0
  %896 = vmatpush1.msra.mxu0 0.0
  %897 = vmatprep.subr.mxu0 0.0
  %898 = vmatpush1.msra.mxu0 0.0
  %899 = vmatprep.subr.mxu0 0.0
  %900 = vmatpush1.msra.mxu0 0.0
  %901 = vmatprep.subr.mxu0 0.0
  %902 = vmatpush1.msra.mxu0 0.0
  %903 = vmatprep.subr.mxu0 0.0
  %904 = vmatpush1.msra.mxu0 0.0
  %905 = vmatprep.subr.mxu0 0.0
  %906 = vmatpush1.msra.mxu0 0.0
  %907 = vmatprep.subr.mxu0 0.0
  %908 = vmatpush1.msra.mxu0 0.0
  %909 = vmatprep.subr.mxu0 0.0
  %910 = vmatpush1.msra.mxu0 0.0
  %911 = vmatprep.subr.mxu0 0.0
  %912 = vmatpush1.msra.mxu0 0.0
  %913 = vmatprep.subr.mxu0 0.0
  %914 = vmatpush1.msra.mxu0 0.0
  %915 = vmatprep.subr.mxu0 0.0
  %916 = vmatpush1.msra.mxu0 0.0
  %917 = vmatprep.subr.mxu0 0.0
  %918 = vmatpush1.msra.mxu0 0.0
  %919 = vmatprep.subr.mxu0 0.0
  %920 = vmatpush1.msra.mxu0 0.0
  %921 = vmatprep.subr.mxu0 0.0
  %922 = vmatpush1.msra.mxu0 0.0
  %923 = vmatprep.subr.mxu0 0.0
  %924 = vmatpush1.msra.mxu0 0.0
  %925 = vmatprep.subr.mxu0 0.0
  %926 = vmatpush1.msra.mxu0 0.0
  %927 = vmatprep.subr.mxu0 0.0
  %928 = vmatpush1.msra.mxu0 0.0
  %929 = vmatprep.subr.mxu0 0.0
  %930 = vmatpush1.msra.mxu0 0.0
  %931 = vmatprep.subr.mxu0 0.0
  %932 = vmatpush1.msra.mxu0 0.0
  %933 = vmatprep.subr.mxu0 0.0
  %934 = vmatpush1.msra.mxu0 0.0
  %935 = vmatprep.subr.mxu0 0.0
  %936 = vmatpush1.msra.mxu0 0.0
  %937 = vmatprep.subr.mxu0 0.0
  %938 = vmatpush1.msra.mxu0 0.0
  %939 = vmatprep.subr.mxu0 0.0
  %940 = vmatpush1.msra.mxu0 0.0
  %941 = vmatprep.subr.mxu0 0.0
  %942 = vmatpush1.msra.mxu0 0.0
  %943 = vmatprep.subr.mxu0 0.0
  %944 = vmatpush1.msra.mxu0 0.0
  %945 = vmatprep.subr.mxu0 0.0
  %946 = vmatpush1.msra.mxu0 0.0
  %947 = vmatprep.subr.mxu0 0.0
  %948 = vmatpush1.msra.mxu0 0.0
  %949 = vmatprep.subr.mxu0 0.0
  %950 = vmatpush1.msra.mxu0 0.0
  %951 = vmatprep.subr.mxu0 0.0
  %952 = vmatpush1.msra.mxu0 0.0
  %953 = vmatprep.mubr.f32.mxu0 0.0
  %954 = vmatmul.mubr.f32.gmra.mrb[0].mxu0 %v595
  %v955 = vpop.f32.mrb[0].mxu0
  %v956 = vadd.f32 %v825, %v955
  %v957 = vpop.f32.mrb[0].mxu0
  %v958 = vadd.f32 %v827, %v957
  %959 = vmatprep.mubr.f32.mxu0 0.0
  %960 = vmatmul.mubr.f32.gmra.mrb[0].mxu0 %v598
  %v961 = vpop.f32.mrb[0].mxu0
  %v962 = vadd.f32 %v831, %v961
  %v963 = vpop.f32.mrb[0].mxu0
  %v964 = vadd.f32 %v833, %v963
  %965 = vmatprep.mubr.f32.mxu0 0.0
  %966 = vmatmul.mubr.f32.gmra.mrb[0].mxu0 %v601
  %v967 = vpop.f32.mrb[0].mxu0
  %v968 = vadd.f32 %v837, %v967
  %v969 = vpop.f32.mrb[0].mxu0
  %v970 = vadd.f32 %v839, %v969
  %971 = vmatprep.mubr.f32.mxu0 0.0
  %972 = vmatmul.mubr.f32.gmra.mrb[0].mxu0 %v604
  %v973 = vpop.f32.mrb[0].mxu0
  %v974 = vadd.f32 %v843, %v973
  %v975 = vpop.f32.mrb[0].mxu0
  %v976 = vadd.f32 %v845, %v975
  %977 = vmatprep.mubr.f32.mxu0 0.0
  %978 = vmatmul.mubr.f32.gmra.mrb[0].mxu0 %v607
  %v979 = vpop.f32.mrb[0].mxu0
  %v980 = vadd.f32 %v849, %v979
  %v981 = vpop.f32.mrb[0].mxu0
  %v982 = vadd.f32 %v851, %v981
  %983 = vmatprep.mubr.f32.mxu0 0.0
  %984 = vmatmul.mubr.f32.gmra.mrb[0].mxu0 %v610
  %v985 = vpop.f32.mrb[0].mxu0
  %v986 = vadd.f32 %v855, %v985
  %v987 = vpop.f32.mrb[0].mxu0
  %v988 = vadd.f32 %v857, %v987
  %989 = vmatprep.mubr.f32.mxu0 0.0
  %990 = vmatmul.mubr.f32.gmra.mrb[0].mxu0 %v613
  %v991 = vpop.f32.mrb[0].mxu0
  %v992 = vadd.f32 %v861, %v991
  %v993 = vpop.f32.mrb[0].mxu0
  %v994 = vadd.f32 %v863, %v993
  %995 = vmatprep.mubr.f32.mxu0 0.0
  %996 = vmatmul.mubr.f32.gmra.mrb[0].mxu0 %v616
  %v997 = vpop.f32.mrb[0].mxu0
  %v998 = vadd.f32 %v867, %v997
  %v999 = vpop.f32.mrb[0].mxu0
  %v1000 = vadd.f32 %v869, %v999
  %1001 = vmatprep.mubr.f32.mxu0 0.0
  %1002 = vmatmul.mubr.f32.gmra.mrb[0].mxu0 %v619
  %v1003 = vpop.f32.mrb[0].mxu0
  %v1004 = vadd.f32 %v873, %v1003
  %v1005 = vpop.f32.mrb[0].mxu0
  %v1006 = vadd.f32 %v875, %v1005
  %1007 = vmatprep.mubr.f32.mxu0 0.0
  %1008 = vmatmul.mubr.f32.gmra.mrb[0].mxu0 %v622
  %v1009 = vpop.f32.mrb[0].mxu0
  %v1010 = vadd.f32 %v879, %v1009
  %v1011 = vpop.f32.mrb[0].mxu0
  %v1012 = vadd.f32 %v881, %v1011
  %1013 = vmatprep.mubr.f32.mxu0 0.0
  %1014 = vmatmul.mubr.f32.gmra.mrb[0].mxu0 %v625
  %v1015 = vpop.f32.mrb[0].mxu0
  %v1016 = vadd.f32 %v885, %v1015
  %v1017 = vpop.f32.mrb[0].mxu0
  %v1018 = vadd.f32 %v887, %v1017
  %1019 = vdwg.mxu0
  %vm1020 = vcmask 556032
  %v1021 = vsel %vm1020, %v958, 0.0
  %v1022 = vadd.f32 %v956, %v1021
  %1023 = vadd.xlane.f32.xlu0 %v1022
  %v1024 = vpop.xlane.xlu0 %1023
  %v1025 = vsel %vm1020, %v964, 0.0
  %v1026 = vadd.f32 %v962, %v1025
  %1027 = vadd.xlane.f32.xlu0 %v1026
  %v1028 = vpop.xlane.xlu0 %1027
  %v1029 = vsel %vm1020, %v970, 0.0
  %v1030 = vadd.f32 %v968, %v1029
  %1031 = vadd.xlane.f32.xlu0 %v1030
  %v1032 = vpop.xlane.xlu0 %1031
  %v1033 = vsel %vm1020, %v976, 0.0
  %v1034 = vadd.f32 %v974, %v1033
  %1035 = vadd.xlane.f32.xlu0 %v1034
  %v1036 = vpop.xlane.xlu0 %1035
  %v1037 = vsel %vm1020, %v982, 0.0
  %v1038 = vadd.f32 %v980, %v1037
  %1039 = vadd.xlane.f32.xlu0 %v1038
  %v1040 = vpop.xlane.xlu0 %1039
  %v1041 = vsel %vm1020, %v988, 0.0
  %v1042 = vadd.f32 %v986, %v1041
  %1043 = vadd.xlane.f32.xlu0 %v1042
  %v1044 = vpop.xlane.xlu0 %1043
  %v1045 = vsel %vm1020, %v994, 0.0
  %v1046 = vadd.f32 %v992, %v1045
  %1047 = vadd.xlane.f32.xlu0 %v1046
  %v1048 = vpop.xlane.xlu0 %1047
  %v1049 = vsel %vm1020, %v1000, 0.0
  %v1050 = vadd.f32 %v998, %v1049
  %1051 = vadd.xlane.f32.xlu0 %v1050
  %v1052 = vpop.xlane.xlu0 %1051
  %v1053 = vsel %vm1020, %v1006, 0.0
  %v1054 = vadd.f32 %v1004, %v1053
  %1055 = vadd.xlane.f32.xlu0 %v1054
  %v1056 = vpop.xlane.xlu0 %1055
  %v1057 = vsel %vm1020, %v1012, 0.0
  %v1058 = vadd.f32 %v1010, %v1057
  %1059 = vadd.xlane.f32.xlu0 %v1058
  %v1060 = vpop.xlane.xlu0 %1059
  %v1061 = vsel %vm1020, %v1018, 0.0
  %v1062 = vadd.f32 %v1016, %v1061
  %1063 = vadd.xlane.f32.xlu0 %v1062
  %v1064 = vpop.xlane.xlu0 %1063
  %v1065 = vrcp.pop 196.0
  %v1066 = vmul.f32 %v1024, %v1065
  %v1067 = vmul.f32 %v1028, %v1065
  %v1068 = vmul.f32 %v1032, %v1065
  %v1069 = vmul.f32 %v1036, %v1065
  %v1070 = vmul.f32 %v1040, %v1065
  %v1071 = vmul.f32 %v1044, %v1065
  %v1072 = vmul.f32 %v1048, %v1065
  %v1073 = vmul.f32 %v1052, %v1065
  %v1074 = vmul.f32 %v1056, %v1065
  %v1075 = vmul.f32 %v1060, %v1065
  %v1076 = vmul.f32 %v1064, %v1065
  %v1077 = vsub.f32 %v956, %v1066
  %v1078 = vsub.f32 %v958, %v1066
  %v1079 = vsub.f32 %v962, %v1067
  %v1080 = vsub.f32 %v964, %v1067
  %v1081 = vsub.f32 %v968, %v1068
  %v1082 = vsub.f32 %v970, %v1068
  %v1083 = vsub.f32 %v974, %v1069
  %v1084 = vsub.f32 %v976, %v1069
  %v1085 = vsub.f32 %v980, %v1070
  %v1086 = vsub.f32 %v982, %v1070
  %v1087 = vsub.f32 %v986, %v1071
  %v1088 = vsub.f32 %v988, %v1071
  %v1089 = vsub.f32 %v992, %v1072
  %v1090 = vsub.f32 %v994, %v1072
  %v1091 = vsub.f32 %v998, %v1073
  %v1092 = vsub.f32 %v1000, %v1073
  %v1093 = vsub.f32 %v1004, %v1074
  %v1094 = vsub.f32 %v1006, %v1074
  %v1095 = vsub.f32 %v1010, %v1075
  %v1096 = vsub.f32 %v1012, %v1075
  %v1097 = vsub.f32 %v1016, %v1076
  %v1098 = vsub.f32 %v1018, %v1076
  %v1099 = vmul.f32 %v1077, %v1077
  %v1100 = vmul.f32 %v1078, %v1078
  %v1101 = vmul.f32 %v1079, %v1079
  %v1102 = vmul.f32 %v1080, %v1080
  %v1103 = vmul.f32 %v1081, %v1081
  %v1104 = vmul.f32 %v1082, %v1082
  %v1105 = vmul.f32 %v1083, %v1083
  %v1106 = vmul.f32 %v1084, %v1084
  %v1107 = vmul.f32 %v1085, %v1085
  %v1108 = vmul.f32 %v1086, %v1086
  %v1109 = vmul.f32 %v1087, %v1087
  %v1110 = vmul.f32 %v1088, %v1088
  %v1111 = vmul.f32 %v1089, %v1089
  %v1112 = vmul.f32 %v1090, %v1090
  %v1113 = vmul.f32 %v1091, %v1091
  %v1114 = vmul.f32 %v1092, %v1092
  %v1115 = vmul.f32 %v1093, %v1093
  %v1116 = vmul.f32 %v1094, %v1094
  %v1117 = vmul.f32 %v1095, %v1095
  %v1118 = vmul.f32 %v1096, %v1096
  %v1119 = vmul.f32 %v1097, %v1097
  %v1120 = vmul.f32 %v1098, %v1098
  %v1121 = vsel %vm1020, %v1100, 0.0
  %v1122 = vadd.f32 %v1099, %v1121
  %1123 = vadd.xlane.f32.xlu0 %v1122
  %v1124 = vpop.xlane.xlu0 %1123
  %v1125 = vsel %vm1020, %v1102, 0.0
  %v1126 = vadd.f32 %v1101, %v1125
  %1127 = vadd.xlane.f32.xlu0 %v1126
  %v1128 = vpop.xlane.xlu0 %1127
  %v1129 = vsel %vm1020, %v1104, 0.0
  %v1130 = vadd.f32 %v1103, %v1129
  %1131 = vadd.xlane.f32.xlu0 %v1130
  %v1132 = vpop.xlane.xlu0 %1131
  %v1133 = vsel %vm1020, %v1106, 0.0
  %v1134 = vadd.f32 %v1105, %v1133
  %1135 = vadd.xlane.f32.xlu0 %v1134
  %v1136 = vpop.xlane.xlu0 %1135
  %v1137 = vsel %vm1020, %v1108, 0.0
  %v1138 = vadd.f32 %v1107, %v1137
  %1139 = vadd.xlane.f32.xlu0 %v1138
  %v1140 = vpop.xlane.xlu0 %1139
  %v1141 = vsel %vm1020, %v1110, 0.0
  %v1142 = vadd.f32 %v1109, %v1141
  %1143 = vadd.xlane.f32.xlu0 %v1142
  %v1144 = vpop.xlane.xlu0 %1143
  %v1145 = vsel %vm1020, %v1112, 0.0
  %v1146 = vadd.f32 %v1111, %v1145
  %1147 = vadd.xlane.f32.xlu0 %v1146
  %v1148 = vpop.xlane.xlu0 %1147
  %v1149 = vsel %vm1020, %v1114, 0.0
  %v1150 = vadd.f32 %v1113, %v1149
  %1151 = vadd.xlane.f32.xlu0 %v1150
  %v1152 = vpop.xlane.xlu0 %1151
  %v1153 = vsel %vm1020, %v1116, 0.0
  %v1154 = vadd.f32 %v1115, %v1153
  %1155 = vadd.xlane.f32.xlu0 %v1154
  %v1156 = vpop.xlane.xlu0 %1155
  %v1157 = vsel %vm1020, %v1118, 0.0
  %v1158 = vadd.f32 %v1117, %v1157
  %1159 = vadd.xlane.f32.xlu0 %v1158
  %v1160 = vpop.xlane.xlu0 %1159
  %v1161 = vsel %vm1020, %v1120, 0.0
  %v1162 = vadd.f32 %v1119, %v1161
  %1163 = vadd.xlane.f32.xlu0 %v1162
  %v1164 = vpop.xlane.xlu0 %1163
  %v1165 = vmul.f32 %v1124, %v1065
  %v1166 = vmul.f32 %v1128, %v1065
  %v1167 = vmul.f32 %v1132, %v1065
  %v1168 = vmul.f32 %v1136, %v1065
  %v1169 = vmul.f32 %v1140, %v1065
  %v1170 = vmul.f32 %v1144, %v1065
  %v1171 = vmul.f32 %v1148, %v1065
  %v1172 = vmul.f32 %v1152, %v1065
  %v1173 = vmul.f32 %v1156, %v1065
  %v1174 = vmul.f32 %v1160, %v1065
  %v1175 = vmul.f32 %v1164, %v1065
  %v1176 = vadd.f32 %v1165, 1e-05
  %v1177 = vadd.f32 %v1166, 1e-05
  %v1178 = vadd.f32 %v1167, 1e-05
  %v1179 = vadd.f32 %v1168, 1e-05
  %v1180 = vadd.f32 %v1169, 1e-05
  %v1181 = vadd.f32 %v1170, 1e-05
  %v1182 = vadd.f32 %v1171, 1e-05
  %v1183 = vadd.f32 %v1172, 1e-05
  %v1184 = vadd.f32 %v1173, 1e-05
  %v1185 = vadd.f32 %v1174, 1e-05
  %v1186 = vadd.f32 %v1175, 1e-05
  %v1187 = vrsqrt.pop %v1176
  %v1188 = vrsqrt.pop %v1177
  %v1189 = vrsqrt.pop %v1178
  %v1190 = vrsqrt.pop %v1179
  %v1191 = vrsqrt.pop %v1180
  %v1192 = vrsqrt.pop %v1181
  %v1193 = vrsqrt.pop %v1182
  %v1194 = vrsqrt.pop %v1183
  %v1195 = vrsqrt.pop %v1184
  %v1196 = vrsqrt.pop %v1185
  %v1197 = vrsqrt.pop %v1186
  %v1198 = vmul.f32 %v1077, %v1187
  %v1199 = vmul.f32 %v1078, %v1187
  %v1200 = vmul.f32 %v1079, %v1188
  %v1201 = vmul.f32 %v1080, %v1188
  %v1202 = vmul.f32 %v1081, %v1189
  %v1203 = vmul.f32 %v1082, %v1189
  %v1204 = vmul.f32 %v1083, %v1190
  %v1205 = vmul.f32 %v1084, %v1190
  %v1206 = vmul.f32 %v1085, %v1191
  %v1207 = vmul.f32 %v1086, %v1191
  %v1208 = vmul.f32 %v1087, %v1192
  %v1209 = vmul.f32 %v1088, %v1192
  %v1210 = vmul.f32 %v1089, %v1193
  %v1211 = vmul.f32 %v1090, %v1193
  %v1212 = vmul.f32 %v1091, %v1194
  %v1213 = vmul.f32 %v1092, %v1194
  %v1214 = vmul.f32 %v1093, %v1195
  %v1215 = vmul.f32 %v1094, %v1195
  %v1216 = vmul.f32 %v1095, %v1196
  %v1217 = vmul.f32 %v1096, %v1196
  %v1218 = vmul.f32 %v1097, %v1197
  %v1219 = vmul.f32 %v1098, %v1197
  %v1220 = vld [vmem:[%s5] sm:$0xff]
  %v1221 = vld [vmem:[%s5 + $0x8] sm:$0xff]
  %v1222 = vld [vmem:[%s5 + $0x10] sm:$0xff]
  %v1223 = vld [vmem:[%s5 + $0x18] sm:$0xff]
  %v1224 = vld [vmem:[%s5 + $0x20] sm:$0xff]
  %v1225 = vld [vmem:[%s5 + $0x28] sm:$0xff]
  %v1226 = vld [vmem:[%s5 + $0x30] sm:$0xff]
  %v1227 = vld [vmem:[%s5 + $0x38] sm:$0xff]
  %v1228 = vld [vmem:[%s5 + $0x40] sm:$0xff]
  %v1229 = vld [vmem:[%s5 + $0x48] sm:$0xff]
  %v1230 = vld [vmem:[%s5 + $0x50] sm:$0xff]
  %1232 = vset.pattern.permute.xlu0 0
  %1233 = vperm.xlu0 %1232, %v1220
  %v1234 = vpop.permute.xlu0 %1233
  %1237 = vset.pattern.permute.xlu0 0
  %1238 = vperm.xlu0 %1237, %v1221
  %v1239 = vpop.permute.xlu0 %1238
  %1242 = vset.pattern.permute.xlu0 0
  %1243 = vperm.xlu0 %1242, %v1222
  %v1244 = vpop.permute.xlu0 %1243
  %1247 = vset.pattern.permute.xlu0 0
  %1248 = vperm.xlu0 %1247, %v1223
  %v1249 = vpop.permute.xlu0 %1248
  %1252 = vset.pattern.permute.xlu0 0
  %1253 = vperm.xlu0 %1252, %v1224
  %v1254 = vpop.permute.xlu0 %1253
  %1257 = vset.pattern.permute.xlu0 0
  %1258 = vperm.xlu0 %1257, %v1225
  %v1259 = vpop.permute.xlu0 %1258
  %1262 = vset.pattern.permute.xlu0 0
  %1263 = vperm.xlu0 %1262, %v1226
  %v1264 = vpop.permute.xlu0 %1263
  %1267 = vset.pattern.permute.xlu0 0
  %1268 = vperm.xlu0 %1267, %v1227
  %v1269 = vpop.permute.xlu0 %1268
  %1272 = vset.pattern.permute.xlu0 0
  %1273 = vperm.xlu0 %1272, %v1228
  %v1274 = vpop.permute.xlu0 %1273
  %1277 = vset.pattern.permute.xlu0 0
  %1278 = vperm.xlu0 %1277, %v1229
  %v1279 = vpop.permute.xlu0 %1278
  %1282 = vset.pattern.permute.xlu0 0
  %1283 = vperm.xlu0 %1282, %v1230
  %v1284 = vpop.permute.xlu0 %1283
  %v1286 = vmul.f32 %v1198, %v1234
  %v1287 = vmul.f32 %v1199, %v1234
  %v1288 = vmul.f32 %v1200, %v1239
  %v1289 = vmul.f32 %v1201, %v1239
  %v1290 = vmul.f32 %v1202, %v1244
  %v1291 = vmul.f32 %v1203, %v1244
  %v1292 = vmul.f32 %v1204, %v1249
  %v1293 = vmul.f32 %v1205, %v1249
  %v1294 = vmul.f32 %v1206, %v1254
  %v1295 = vmul.f32 %v1207, %v1254
  %v1296 = vmul.f32 %v1208, %v1259
  %v1297 = vmul.f32 %v1209, %v1259
  %v1298 = vmul.f32 %v1210, %v1264
  %v1299 = vmul.f32 %v1211, %v1264
  %v1300 = vmul.f32 %v1212, %v1269
  %v1301 = vmul.f32 %v1213, %v1269
  %v1302 = vmul.f32 %v1214, %v1274
  %v1303 = vmul.f32 %v1215, %v1274
  %v1304 = vmul.f32 %v1216, %v1279
  %v1305 = vmul.f32 %v1217, %v1279
  %v1306 = vmul.f32 %v1218, %v1284
  %v1307 = vmul.f32 %v1219, %v1284
  %v1308 = vld [vmem:[%s6] sm:$0xff]
  %v1309 = vld [vmem:[%s6 + $0x8] sm:$0xff]
  %v1310 = vld [vmem:[%s6 + $0x10] sm:$0xff]
  %v1311 = vld [vmem:[%s6 + $0x18] sm:$0xff]
  %v1312 = vld [vmem:[%s6 + $0x20] sm:$0xff]
  %v1313 = vld [vmem:[%s6 + $0x28] sm:$0xff]
  %v1314 = vld [vmem:[%s6 + $0x30] sm:$0xff]
  %v1315 = vld [vmem:[%s6 + $0x38] sm:$0xff]
  %v1316 = vld [vmem:[%s6 + $0x40] sm:$0xff]
  %v1317 = vld [vmem:[%s6 + $0x48] sm:$0xff]
  %v1318 = vld [vmem:[%s6 + $0x50] sm:$0xff]
  %1320 = vset.pattern.permute.xlu0 0
  %1321 = vperm.xlu0 %1320, %v1308
  %v1322 = vpop.permute.xlu0 %1321
  %1325 = vset.pattern.permute.xlu0 0
  %1326 = vperm.xlu0 %1325, %v1309
  %v1327 = vpop.permute.xlu0 %1326
  %1330 = vset.pattern.permute.xlu0 0
  %1331 = vperm.xlu0 %1330, %v1310
  %v1332 = vpop.permute.xlu0 %1331
  %1335 = vset.pattern.permute.xlu0 0
  %1336 = vperm.xlu0 %1335, %v1311
  %v1337 = vpop.permute.xlu0 %1336
  %1340 = vset.pattern.permute.xlu0 0
  %1341 = vperm.xlu0 %1340, %v1312
  %v1342 = vpop.permute.xlu0 %1341
  %1345 = vset.pattern.permute.xlu0 0
  %1346 = vperm.xlu0 %1345, %v1313
  %v1347 = vpop.permute.xlu0 %1346
  %1350 = vset.pattern.permute.xlu0 0
  %1351 = vperm.xlu0 %1350, %v1314
  %v1352 = vpop.permute.xlu0 %1351
  %1355 = vset.pattern.permute.xlu0 0
  %1356 = vperm.xlu0 %1355, %v1315
  %v1357 = vpop.permute.xlu0 %1356
  %1360 = vset.pattern.permute.xlu0 0
  %1361 = vperm.xlu0 %1360, %v1316
  %v1362 = vpop.permute.xlu0 %1361
  %1365 = vset.pattern.permute.xlu0 0
  %1366 = vperm.xlu0 %1365, %v1317
  %v1367 = vpop.permute.xlu0 %1366
  %1370 = vset.pattern.permute.xlu0 0
  %1371 = vperm.xlu0 %1370, %v1318
  %v1372 = vpop.permute.xlu0 %1371
  %v1374 = vadd.f32 %v1286, %v1322
  %v1375 = vadd.f32 %v1287, %v1322
  %v1376 = vadd.f32 %v1288, %v1327
  %v1377 = vadd.f32 %v1289, %v1327
  %v1378 = vadd.f32 %v1290, %v1332
  %v1379 = vadd.f32 %v1291, %v1332
  %v1380 = vadd.f32 %v1292, %v1337
  %v1381 = vadd.f32 %v1293, %v1337
  %v1382 = vadd.f32 %v1294, %v1342
  %v1383 = vadd.f32 %v1295, %v1342
  %v1384 = vadd.f32 %v1296, %v1347
  %v1385 = vadd.f32 %v1297, %v1347
  %v1386 = vadd.f32 %v1298, %v1352
  %v1387 = vadd.f32 %v1299, %v1352
  %v1388 = vadd.f32 %v1300, %v1357
  %v1389 = vadd.f32 %v1301, %v1357
  %v1390 = vadd.f32 %v1302, %v1362
  %v1391 = vadd.f32 %v1303, %v1362
  %v1392 = vadd.f32 %v1304, %v1367
  %v1393 = vadd.f32 %v1305, %v1367
  %v1394 = vadd.f32 %v1306, %v1372
  %v1395 = vadd.f32 %v1307, %v1372
  %1396 = vst [vmem:[%s7] sm:$0xff] %v1374
  %1397 = vst.msk [vmem:[%s7 + $0x8] sm:$0xff] %vm1020, %v1375
  %1398 = vst [vmem:[%s7 + $0x10] sm:$0xff] %v1376
  %1399 = vst.msk [vmem:[%s7 + $0x18] sm:$0xff] %vm1020, %v1377
  %1400 = vst [vmem:[%s7 + $0x20] sm:$0xff] %v1378
  %1401 = vst.msk [vmem:[%s7 + $0x28] sm:$0xff] %vm1020, %v1379
  %1402 = vst [vmem:[%s7 + $0x30] sm:$0xff] %v1380
  %1403 = vst.msk [vmem:[%s7 + $0x38] sm:$0xff] %vm1020, %v1381
  %1404 = vst [vmem:[%s7 + $0x40] sm:$0xff] %v1382
  %1405 = vst.msk [vmem:[%s7 + $0x48] sm:$0xff] %vm1020, %v1383
  %1406 = vst [vmem:[%s7 + $0x50] sm:$0xff] %v1384
  %1407 = vst.msk [vmem:[%s7 + $0x58] sm:$0xff] %vm1020, %v1385
  %1408 = vst [vmem:[%s7 + $0x60] sm:$0xff] %v1386
  %1409 = vst.msk [vmem:[%s7 + $0x68] sm:$0xff] %vm1020, %v1387
  %1410 = vst [vmem:[%s7 + $0x70] sm:$0xff] %v1388
  %1411 = vst.msk [vmem:[%s7 + $0x78] sm:$0xff] %vm1020, %v1389
  %1412 = vst [vmem:[%s7 + $0x80] sm:$0xff] %v1390
  %1413 = vst.msk [vmem:[%s7 + $0x88] sm:$0xff] %vm1020, %v1391
  %1414 = vst [vmem:[%s7 + $0x90] sm:$0xff] %v1392
  %1415 = vst.msk [vmem:[%s7 + $0x98] sm:$0xff] %vm1020, %v1393
  %1416 = vst [vmem:[%s7 + $0xa0] sm:$0xff] %v1394
  %1417 = vst.msk [vmem:[%s7 + $0xa8] sm:$0xff] %vm1020, %v1395
  // Predicated region
  $region30: #{m_forward.1} parent=0 // pred_check
    _
  $region31: #{m_forward.1} parent=0 // pred_check_branch
    %1419 = sbr.rel (0) target = $region33
  $region32: #{m_forward.1} parent=0 // pred_region
    _
  $region33: #{m_forward.1} parent=0 // pred_fallthru
    _
  // Predicated region
  $region34: #{m_forward.1} parent=0 // pred_check
    _
  $region35: #{m_forward.1} parent=0 // pred_check_branch
    %1421 = sbr.rel (0) target = $region37
  $region36: #{m_forward.1} parent=0 // pred_region
    _
  $region37: #{m_forward.1} parent=0 // pred_fallthru
    _

</llo_original>
